<compile_context>
chip_gen: v6e
topology: v6e:2x2x1
jax: 0.10.0
libtpu: 0.0.40
codegen_flags: <defaults>
</compile_context>

<pallas_src>
import jax
import jax.numpy as jnp
from jax.experimental import pallas as pl
from jax.experimental.pallas import tpu as pltpu

LANES = 128
MAX_TILE_ROWS = 2048   # 2048x128 f32 = 1 MiB per pipeline buffer
ROW_ALIGN = 32         # keeps block rows legal for f32/bf16/int8 sublane packing


def _disc_loss_kernel(x_ref, out_ref):
    """x_ref: (1, block_rows, 128) logits (fake or -real, -inf padded).
    out_ref: (1, 8, 128) f32 partial-sum accumulator (resident across t)."""
    t = pl.program_id(1)

    @pl.when(t == 0)
    def _init():
        out_ref[...] = jnp.zeros_like(out_ref)

    x = x_ref[...].astype(jnp.float32)
    # Numerically stable softplus; softplus(-inf) == 0 exactly, so padding
    # (and any all-padding tiles of the smaller tensor) contributes nothing.
    sp = jnp.maximum(x, 0.0) + jnp.log1p(jnp.exp(-jnp.abs(x)))
    # Sublane-group partial reduce (pure VPU adds); cross-lane reduce deferred.
    partial = sp.reshape(-1, 8, LANES).sum(axis=0)          # (8, 128)
    out_ref[...] += partial[None]


def _round_up(x, m):
    return ((x + m - 1) // m) * m


@jax.jit
def discriminator_loss(fake_pred, real_pred):
    """Scalar GAN discriminator loss. Inputs: any shape (typically NCHW)."""
    n_fake = int(fake_pred.size)
    n_real = int(real_pred.size)
    dtype = jnp.promote_types(fake_pred.dtype, real_pred.dtype)

    max_n = max(n_fake, n_real)
    rows = pl.cdiv(max_n, LANES)
    block_rows = min(MAX_TILE_ROWS, _round_up(rows, ROW_ALIGN))
    num_tiles = pl.cdiv(rows, block_rows)
    padded_rows = num_tiles * block_rows
    n_pad = padded_rows * LANES

    def prep(x, negate):
        x = jnp.ravel(x).astype(dtype)
        if negate:
            x = -x
        # -inf sentinel padding: softplus contribution is exactly 0, no NaN.
        x = jnp.pad(x, (0, n_pad - x.size), constant_values=-jnp.inf)
        return x.reshape(padded_rows, LANES)

    # Row 0: fake logits (target 0 -> softplus(x));
    # row 1: -real logits (target 1 -> softplus(-x)).
    stacked = jnp.stack([prep(fake_pred, False), prep(real_pred, True)])

    partials = pl.pallas_call(
        _disc_loss_kernel,
        out_shape=jax.ShapeDtypeStruct((2, 8, LANES), jnp.float32),
        grid_spec=pltpu.PrefetchScalarGridSpec(
            num_scalar_prefetch=0,
            grid=(2, num_tiles),
            in_specs=[
                pl.BlockSpec((1, block_rows, LANES), lambda g, t: (g, t, 0)),
            ],
            out_specs=pl.BlockSpec((1, 8, LANES), lambda g, t: (g, 0, 0)),
        ),
        compiler_params=pltpu.CompilerParams(
            dimension_semantics=("parallel", "arbitrary"),
        ),
    )(stacked)

    sums = jnp.sum(partials, axis=(1, 2))                   # (2,) f32
    fake_mean = sums[0] / jnp.float32(n_fake)
    real_mean = sums[1] / jnp.float32(n_real)
    return (fake_mean + real_mean) * jnp.float32(0.5)


def _reference_loss(fake_pred, real_pred):
    fake = fake_pred.astype(jnp.float32)
    real = real_pred.astype(jnp.float32)
    fake_loss = jnp.mean(jnp.maximum(fake, 0.0) + jnp.log1p(jnp.exp(-jnp.abs(fake))))
    real_loss = jnp.mean(jnp.maximum(real, 0.0) - real + jnp.log1p(jnp.exp(-jnp.abs(real))))
    return (fake_loss + real_loss) / 2.0


if __name__ == "__main__":
    key = jax.random.PRNGKey(0)
    k_fake, k_real = jax.random.split(key)

    # Discriminator logits, NCHW: batch=2, channels=1, spatial=16x16
    fake_pred = jax.random.normal(k_fake, (2, 1, 16, 16), dtype=jnp.float32)
    real_pred = jax.random.normal(k_real, (2, 1, 16, 16), dtype=jnp.float32)

    loss = discriminator_loss(fake_pred, real_pred)
    jax.block_until_ready(loss)

    ref = _reference_loss(fake_pred, real_pred)
    assert jnp.allclose(loss, ref, atol=1e-5, rtol=1e-5), (loss, ref)

    print("KERNEL_OK")
</pallas_src>

<mosaic_0001>
module attributes {stable_mosaic.version = 11 : i64} {
  func.func @_disc_loss_kernel(%arg0: i32, %arg1: i32, %arg2: memref<1x32x128xf32, #tpu.memory_space<vmem>>, %arg3: memref<1x8x128xf32, #tpu.memory_space<vmem>>) attributes {dimension_semantics = [#tpu.dimension_semantics<parallel>, #tpu.dimension_semantics<arbitrary>], iteration_bounds = array<i64: 2, 1>, scalar_prefetch = 0 : i64, scratch_operands = 0 : i64, tpu.core_type = #tpu.core_type<tc>, window_params = [{transform_indices = @transform_0, window_bounds = array<i64: 1, 32, 128>}, {transform_indices = @transform_1, window_bounds = array<i64: 1, 8, 128>}]} {
    %c0_i32 = arith.constant 0 : i32
    %0 = arith.cmpi eq, %arg1, %c0_i32 : i32
    %1 = arith.extui %0 : i1 to i32
    %c0_i32_0 = arith.constant 0 : i32
    %2 = arith.cmpi ne, %1, %c0_i32_0 : i32
    scf.if %2 {
      %cst_11 = arith.constant 0.000000e+00 : f32
      %18 = vector.broadcast %cst_11 : f32 to vector<1x8x128xf32>
      %c0_12 = arith.constant 0 : index
      %c0_13 = arith.constant 0 : index
      %c0_14 = arith.constant 0 : index
      %19 = vector.load %arg3[%c0_12, %c0_13, %c0_14] : memref<1x8x128xf32, #tpu.memory_space<vmem>>, vector<1x8x128xf32>
      tpu.vector_store %arg3[%c0_12, %c0_13, %c0_14], %18 {strides = array<i32>} : memref<1x8x128xf32, #tpu.memory_space<vmem>>, vector<1x8x128xf32>,
    } else {
    }
    %c0 = arith.constant 0 : index
    %c0_1 = arith.constant 0 : index
    %c0_2 = arith.constant 0 : index
    %3 = vector.load %arg2[%c0, %c0_1, %c0_2] : memref<1x32x128xf32, #tpu.memory_space<vmem>>, vector<1x32x128xf32>
    %cst = arith.constant 0.000000e+00 : f32
    %4 = vector.broadcast %cst : f32 to vector<1x32x128xf32>
    %5 = arith.maximumf %3, %4 : vector<1x32x128xf32>
    %6 = math.absf %3 : vector<1x32x128xf32>
    %cst_3 = arith.constant 0.000000e+00 : f32
    %7 = vector.broadcast %cst_3 : f32 to vector<1x32x128xf32>
    %8 = arith.subf %7, %6 : vector<1x32x128xf32>
    %9 = math.exp %8 : vector<1x32x128xf32>
    %10 = math.log1p %9 : vector<1x32x128xf32>
    %11 = arith.addf %5, %10 : vector<1x32x128xf32>
    %12 = vector.shape_cast %11 : vector<1x32x128xf32> to vector<4x8x128xf32>
    %cst_4 = arith.constant dense<0.000000e+00> : vector<8x128xf32>
    %13 = vector.multi_reduction <add>, %12, %cst_4 [0] : vector<4x8x128xf32> to vector<8x128xf32>
    %c0_5 = arith.constant 0 : index
    %c0_6 = arith.constant 0 : index
    %c0_7 = arith.constant 0 : index
    %14 = vector.load %arg3[%c0_5, %c0_6, %c0_7] : memref<1x8x128xf32, #tpu.memory_space<vmem>>, vector<1x8x128xf32>
    %15 = vector.shape_cast %13 : vector<8x128xf32> to vector<1x8x128xf32>
    %16 = arith.addf %14, %15 : vector<1x8x128xf32>
    %c0_8 = arith.constant 0 : index
    %c0_9 = arith.constant 0 : index
    %c0_10 = arith.constant 0 : index
    %17 = vector.load %arg3[%c0_8, %c0_9, %c0_10] : memref<1x8x128xf32, #tpu.memory_space<vmem>>, vector<1x8x128xf32>
    tpu.vector_store %arg3[%c0_8, %c0_9, %c0_10], %16 {strides = array<i32>} : memref<1x8x128xf32, #tpu.memory_space<vmem>>, vector<1x8x128xf32>,
    return
  }
  func.func @transform_0(%arg0: i32, %arg1: i32) -> (i32, i32, i32) {
    %c0_i32 = arith.constant 0 : i32
    %c0_i32_0 = arith.constant 0 : i32
    return %arg0, %arg1, %c0_i32 : i32, i32, i32
  }
  func.func @transform_1(%arg0: i32, %arg1: i32) -> (i32, i32, i32) {
    %c0_i32 = arith.constant 0 : i32
    %c0_i32_0 = arith.constant 0 : i32
    %c0_i32_1 = arith.constant 0 : i32
    return %arg0, %c0_i32, %c0_i32_0 : i32, i32, i32
  }
}

</mosaic_0001>

<llo_original>
// kernel: neg.0
$region0: #{neg.0}
  #allocation0 [shape = 's32[1]{0}', space=sflag, size = 0x4, scoped, tag = 'scoped memory for neg.0']
  %s0 = inlined_call_operand.vmem [shape: f32[2,1,16,16], index: 0, kind: input, shape index: {}]
  %s1 = inlined_call_operand.vmem [shape: f32[2,1,16,16], index: 1, kind: output, shape index: {}]
  %v2 = vld [vmem:[%s0] sm:$0xff]
  %3 = xla_tuple %v2
  %4 = xla_tuple %3
  %v5 = vxor.u32 %v2, 2147483648
  %6 = xla_tuple %v5
  %7 = vst [vmem:[%s1] sm:$0xff] %v5
  %s8 = scalar_lea.vmem %s0, 16
  %v9 = vld [vmem:[%s8] sm:$0xff]
  %10 = xla_tuple %v9
  %11 = xla_tuple %10
  %v12 = vxor.u32 %v9, 2147483648
  %13 = xla_tuple %v12
  %s14 = scalar_lea.vmem %s1, 16
  %15 = vst [vmem:[%s14] sm:$0xff] %v12
  %s16 = scalar_lea.vmem %s0, 8
  %v17 = vld [vmem:[%s16] sm:$0xff]
  %18 = xla_tuple %v17
  %19 = xla_tuple %18
  %v20 = vxor.u32 %v17, 2147483648
  %21 = xla_tuple %v20
  %s22 = scalar_lea.vmem %s1, 8
  %23 = vst [vmem:[%s22] sm:$0xff] %v20
  %s24 = scalar_lea.vmem %s0, 24
  %v25 = vld [vmem:[%s24] sm:$0xff]
  %26 = xla_tuple %v25
  %27 = xla_tuple %26
  %v28 = vxor.u32 %v25, 2147483648
  %29 = xla_tuple %v28
  %s30 = scalar_lea.vmem %s1, 24
  %31 = vst [vmem:[%s30] sm:$0xff] %v28

// kernel: discriminator_loss.1
$region0: #{discriminator_loss.1}
  #allocation0 [shape = 'u32[]', space=smem, size = 0x4, offset = 0x4, fixed_abs, tag = 'smem constant byte address 0x4 - core index']
  #allocation1 [shape = 'u32[144,128]{1,0:T(1,128)}', space=vmem, size = 0x12000, scoped, tag = 'internal scratch']
  %s0 = inlined_call_operand.vmem [shape: f32[2,32,128], index: 0, kind: input, shape index: {}]
  %s1 = inlined_call_operand.vmem [shape: f32[2,8,128], index: 1, kind: output, shape index: {}]
  %s2 = sld [smem:[#allocation0]]
  $region41: #{discriminator_loss.1} parent=0
    _
  %s4 = ssub.s32 1, %s2
  %s5 = scalar_select 0, %s4, %s2
  loop: start=0, step=1, limit=4
  $region2: #{discriminator_loss.1} parent=0 // loop_pre_header
    _
  $region3: #{discriminator_loss.1} parent=0 // loop_header
    %s7 = sphi 0, %s11
    %p8 = scmp.ge.s32.totalorder %s7, 4
    %s14 = sphi 0, %s26
    %s15 = sphi 0, %s22
    %s16 = sphi 0, %s14
    %s17 = sphi 0, %s15
    %s18 = sphi 0, %s16
    %s19 = sphi 0, %s17
    %s31 = sphi 0, %s33
    %s34 = sphi 0, %s31
    %s35 = sphi 0, %s34
    %s51 = sphi 0, %s35
    %s57 = sphi 0, %s59
    %s60 = sphi 0, %s57
    %s61 = sphi 0, %s60
    %s77 = sphi 0, %s61
  $region4: #{discriminator_loss.1} parent=0 // loop_header_branch
    %10 = sbr.rel (%p8) target = $region8
  $region5: #{discriminator_loss.1} parent=0 // loop_body
    %s12 = ssub.s32 %s7, 1
    %s13 = ssub.s32 %s7, 2
    %s20 = sadd.s32 1, %s15
    %p21 = scmp.ge.s32.totalorder %s20, 1
    %s22 = scalar_select %p21, 0, %s20
    %s23 = sadd.s32 1, %s14
    %s24 = scalar_select %p21, %s23, %s14
    %p25 = scmp.ge.s32.totalorder %s24, 2
    %s26 = scalar_select %p25, 0, %s24
    %s27 = ssub.s32 %s14, %s26
    %s28 = ssub.s32 %s15, %s22
    %s29 = sor.u32 %s27, %s28
    %p30 = scmp.eq.s32.totalorder %s29, 0
    %s32 = sadd.s32 %s31, 1
    %s33 = scalar_select %p30, %s31, %s32
    %p36 = pneg %p30
    %p37 = scmp.eq.s32.totalorder %s7, 1
    %p38 = por %p36, %p37
    %p39 = scmp.ne.s32.totalorder %s31, %s34
    %p40 = scmp.eq.s32.totalorder %s7, 0
    %p41 = por %p39, %p40
    %p42 = scmp.ne.s32.totalorder %s31, %s34
    %p43 = scmp.eq.s32.totalorder %s12, 1
    %p44 = por %p42, %p43
    %p45 = scmp.ne.s32.totalorder %s34, %s35
    %p46 = scmp.eq.s32.totalorder %s12, 0
    %p47 = por %p45, %p46
    %p48 = scmp.ne.s32.totalorder %s34, %s35
    %p49 = scmp.eq.s32.totalorder %s13, 1
    %p50 = por %p48, %p49
    %p52 = scmp.ne.s32.totalorder %s35, %s51
    %p53 = scmp.eq.s32.totalorder %s13, 0
    %p54 = por %p52, %p53
    %s55 = ssub.s32 %s14, %s26
    %p56 = scmp.eq.s32.totalorder %s55, 0
    %s58 = sadd.s32 %s57, 1
    %s59 = scalar_select %p56, %s57, %s58
    %p62 = pneg %p56
    %p63 = scmp.eq.s32.totalorder %s7, 1
    %p64 = por %p62, %p63
    %p65 = scmp.ne.s32.totalorder %s57, %s60
    %p66 = scmp.eq.s32.totalorder %s7, 0
    %p67 = por %p65, %p66
    %p68 = scmp.ne.s32.totalorder %s57, %s60
    %p69 = scmp.eq.s32.totalorder %s12, 1
    %p70 = por %p68, %p69
    %p71 = scmp.ne.s32.totalorder %s60, %s61
    %p72 = scmp.eq.s32.totalorder %s12, 0
    %p73 = por %p71, %p72
    %p74 = scmp.ne.s32.totalorder %s60, %s61
    %p75 = scmp.eq.s32.totalorder %s13, 1
    %p76 = por %p74, %p75
    %p78 = scmp.ne.s32.totalorder %s61, %s77
    %p79 = scmp.eq.s32.totalorder %s13, 0
    %p80 = por %p78, %p79
    %p81 = scmp.le.s32.totalorder 1, %s7
    %p82 = scmp.lt.s32.totalorder %s7, 3
    %p83 = pnand %p81, %p82
    %p84 = pneg %p83
    // Predicated region
    $region9: #{discriminator_loss.1} parent=5 // pred_check
      _
    $region10: #{discriminator_loss.1} parent=5 // pred_check_branch
      %86 = sbr.rel (%p83) target = $region12
    $region11: #{discriminator_loss.1} parent=5 // pred_region
      %s87 = ssub.s32 %s7, 1
    $region12: #{discriminator_loss.1} parent=5 // pred_fallthru
      _
    %p88 = scmp.lt.s32.totalorder %s7, 2
    // Predicated region
    $region13: #{discriminator_loss.1} parent=5 // pred_check
      %p89 = pneg %p88
    $region14: #{discriminator_loss.1} parent=5 // pred_check_branch
      %91 = sbr.rel (%p89) target = $region16
    $region15: #{discriminator_loss.1} parent=5 // pred_region
      // Predicated region
      $region17: #{discriminator_loss.1} parent=15 // pred_check
        %p92 = pneg %p41
      $region18: #{discriminator_loss.1} parent=15 // pred_check_branch
        %94 = sbr.rel (%p92) target = $region20
      $region19: #{discriminator_loss.1} parent=15 // pred_region
        %s95 = smul.u32 4, %s15
        %p96 = scmp.lt.s32.totalorder %s14, 1
        %s97 = scalar_select %p96, %s14, 1
        %p98 = scmp.lt.s32.totalorder %s95, 3
        %s99 = scalar_select %p98, %s95, 3
        %s100 = smul.addr %s97, 4
        %s101 = sadd.s32 %s99, %s100
        %s102 = smul.addr %s101, 8
        %s103 = scalar_lea.vmem %s0, %s102
        %s104 = smul.u32 4, %s15
      $region20: #{discriminator_loss.1} parent=15 // pred_fallthru
        _
    $region16: #{discriminator_loss.1} parent=5 // pred_fallthru
      _
    %p105 = scmp.le.s32.totalorder 1, %s7
    %p106 = scmp.lt.s32.totalorder %s7, 3
    %p107 = pnand %p105, %p106
    %p108 = pneg %p107
    // Predicated region
    $region21: #{discriminator_loss.1} parent=5 // pred_check
      _
    $region22: #{discriminator_loss.1} parent=5 // pred_check_branch
      %110 = sbr.rel (%p107) target = $region24
    $region23: #{discriminator_loss.1} parent=5 // pred_region
      %s111 = ssub.s32 %s7, 1
      %s112 = smul.u32 4, %s17
      %p113 = scmp.lt.s32.totalorder %s16, 1
      %s114 = scalar_select %p113, %s16, 1
      %p115 = scmp.lt.s32.totalorder %s112, 3
      %s116 = scalar_select %p115, %s112, 3
      %s117 = smul.addr %s114, 4
      %s118 = sadd.s32 %s116, %s117
      %s119 = smul.addr %s118, 8
      %s120 = scalar_lea.vmem %s0, %s119
      %p121 = pneg %p47
      %p122 = pneg %p44
      %p123 = pneg %p73
      %p124 = pneg %p70
      %p125 = scmp.lt.s32.totalorder %s16, 1
      %s126 = scalar_select %p125, %s16, 1
      %s127 = smul.addr %s126, 8
      %s128 = scalar_lea.vmem %s1, %s127
      %s129 = smul.u32 4, %s17
      %p130 = scmp.lt.s32.totalorder %s16, 1
      %s131 = scalar_select %p130, %s16, 1
      %p132 = scmp.lt.s32.totalorder %s129, 3
      %s133 = scalar_select %p132, %s129, 3
      %s134 = smul.addr %s131, 4
      %s135 = sadd.s32 %s133, %s134
      %s136 = smul.addr %s135, 8
      %s137 = scalar_lea.vmem %s0, %s136
      %s138 = smul.u32 4, %s17
      %p139 = scmp.lt.s32.totalorder %s16, 1
      %s140 = scalar_select %p139, %s16, 1
      %s141 = smul.addr %s140, 8
      %s142 = scalar_lea.vmem %s1, %s141
      %p143 = scmp.eq.s32.totalorder %s17, 0
      // Predicated region
      $region25: #{discriminator_loss.1} parent=23 // pred_check
        %p144 = pneg %p143
      $region26: #{discriminator_loss.1} parent=23 // pred_check_branch
        %146 = sbr.rel (%p144) target = $region28
      $region27: #{discriminator_loss.1} parent=23 // pred_region
        %147 = vst [vmem:[%s142] sm:$0xff] 0.0
      $region28: #{discriminator_loss.1} parent=23 // pred_fallthru
        _
      %v148 = vld [vmem:[%s137] sm:$0xff]
      %v149 = vld [vmem:[%s137 + $0x8] sm:$0xff]
      %v150 = vld [vmem:[%s137 + $0x10] sm:$0xff]
      %v151 = vld [vmem:[%s137 + $0x18] sm:$0xff]
      %v152 = vmax.f32 %v148, 0.0
      %v153 = vmax.f32 %v149, 0.0
      %v154 = vmax.f32 %v150, 0.0
      %v155 = vmax.f32 %v151, 0.0
      %v156 = vand.u32 2147483647, %v148
      %v157 = vand.u32 2147483647, %v149
      %v158 = vand.u32 2147483647, %v150
      %v159 = vand.u32 2147483647, %v151
      %v160 = vsub.f32 0.0, %v156
      %v161 = vsub.f32 0.0, %v157
      %v162 = vsub.f32 0.0, %v158
      %v163 = vsub.f32 0.0, %v159
      %v164 = vmul.f32 %v160, 1.442695
      %v165 = vpow.pop %v164
      %v166 = vmul.f32 %v161, 1.442695
      %v167 = vpow.pop %v166
      %v168 = vmul.f32 %v162, 1.442695
      %v169 = vpow.pop %v168
      %v170 = vmul.f32 %v163, 1.442695
      %v171 = vpow.pop %v170
      %v172 = vadd.f32 %v165, 1.0
      %v173 = vlog2.pop %v172
      %v174 = vmul.f32 %v173, 0.6931472
      %v175 = vmul.f32 -0.5, %v165
      %v176 = vadd.f32 %v175, 1.0
      %v177 = vmul.f32 %v176, %v165
      %v178 = vand.u32 2147483647, %v165
      %vm179 = vcmp.lt.f32.partialorder %v178, 0.0004427343
      %v180 = vsel %vm179, %v177, %v174
      %v181 = vadd.f32 %v167, 1.0
      %v182 = vlog2.pop %v181
      %v183 = vmul.f32 %v182, 0.6931472
      %v184 = vmul.f32 -0.5, %v167
      %v185 = vadd.f32 %v184, 1.0
      %v186 = vmul.f32 %v185, %v167
      %v187 = vand.u32 2147483647, %v167
      %vm188 = vcmp.lt.f32.partialorder %v187, 0.0004427343
      %v189 = vsel %vm188, %v186, %v183
      %v190 = vadd.f32 %v169, 1.0
      %v191 = vlog2.pop %v190
      %v192 = vmul.f32 %v191, 0.6931472
      %v193 = vmul.f32 -0.5, %v169
      %v194 = vadd.f32 %v193, 1.0
      %v195 = vmul.f32 %v194, %v169
      %v196 = vand.u32 2147483647, %v169
      %vm197 = vcmp.lt.f32.partialorder %v196, 0.0004427343
      %v198 = vsel %vm197, %v195, %v192
      %v199 = vadd.f32 %v171, 1.0
      %v200 = vlog2.pop %v199
      %v201 = vmul.f32 %v200, 0.6931472
      %v202 = vmul.f32 -0.5, %v171
      %v203 = vadd.f32 %v202, 1.0
      %v204 = vmul.f32 %v203, %v171
      %v205 = vand.u32 2147483647, %v171
      %vm206 = vcmp.lt.f32.partialorder %v205, 0.0004427343
      %v207 = vsel %vm206, %v204, %v201
      %v208 = vadd.f32 %v152, %v180
      %v209 = vadd.f32 %v153, %v189
      %v210 = vadd.f32 %v154, %v198
      %v211 = vadd.f32 %v155, %v207
      %v212 = vadd.f32 %v208, %v209
      %v213 = vadd.f32 %v212, %v210
      %v214 = vadd.f32 %v213, %v211
      %v215 = vld [vmem:[%s142] sm:$0xff]
      %v216 = vadd.f32 %v215, %v214
      %217 = vst [vmem:[%s142] sm:$0xff] %v216
      %p218 = scmp.lt.s32.totalorder %s16, 1
      %s219 = scalar_select %p218, %s16, 1
      %s220 = smul.addr %s219, 8
      %s221 = scalar_lea.vmem %s1, %s220
      // Predicated region
      $region29: #{discriminator_loss.1} parent=23 // pred_check
        %p222 = pneg %p70
      $region30: #{discriminator_loss.1} parent=23 // pred_check_branch
        %224 = sbr.rel (%p222) target = $region32
      $region31: #{discriminator_loss.1} parent=23 // pred_region
        _
      $region32: #{discriminator_loss.1} parent=23 // pred_fallthru
        _
    $region24: #{discriminator_loss.1} parent=5 // pred_fallthru
      _
    %p225 = scmp.le.s32.totalorder 2, %s7
    // Predicated region
    $region33: #{discriminator_loss.1} parent=5 // pred_check
      %p226 = pneg %p225
    $region34: #{discriminator_loss.1} parent=5 // pred_check_branch
      %228 = sbr.rel (%p226) target = $region36
    $region35: #{discriminator_loss.1} parent=5 // pred_region
      %s229 = ssub.s32 %s7, 2
      // Predicated region
      $region37: #{discriminator_loss.1} parent=35 // pred_check
        %p230 = pneg %p76
      $region38: #{discriminator_loss.1} parent=35 // pred_check_branch
        %232 = sbr.rel (%p230) target = $region40
      $region39: #{discriminator_loss.1} parent=35 // pred_region
        %p233 = scmp.lt.s32.totalorder %s18, 1
        %s234 = scalar_select %p233, %s18, 1
        %s235 = smul.addr %s234, 8
        %s236 = scalar_lea.vmem %s1, %s235
      $region40: #{discriminator_loss.1} parent=35 // pred_fallthru
        _
    $region36: #{discriminator_loss.1} parent=5 // pred_fallthru
      _
  $region6: #{discriminator_loss.1} parent=0 // loop_footer
    %s11 = sadd.s32 1, %s7
  $region7: #{discriminator_loss.1} parent=0 // loop_footer_branch
    %6 = sbr.rel target = $region3
  $region8: #{discriminator_loss.1} parent=0 // loop_exit
    _

</llo_original>
